<compile_context>
chip_gen: v5e
topology: v5e:2x2
jax: 0.10.0
libtpu: 0.0.40
codegen_flags: <defaults>
</compile_context>

<pallas_src>
import jax
import jax.numpy as jnp
from jax.experimental import pallas as pl
from jax.experimental.pallas import tpu as pltpu

LANE = 128


def _round_up(x, m):
    return ((x + m - 1) // m) * m


def mlp_kernel(x_ref, w1_ref, b1_ref, w2_ref, b2_ref, o_ref):
    # hidden = relu(x @ W1 + b1)   -- bf16 inputs, f32 accumulation
    h = jnp.dot(x_ref[...], w1_ref[...], preferred_element_type=jnp.float32)
    h = jnp.maximum(h + b1_ref[...], 0.0)           # (TB, Hp) + (1, Hp), f32
    # out = hidden @ W2 + b2       -- cast hidden back to bf16 for the MXU
    y = jnp.dot(h.astype(w2_ref.dtype), w2_ref[...],
                preferred_element_type=jnp.float32)
    o_ref[...] = (y + b2_ref[...]).astype(o_ref.dtype)   # lane-dense store


def neural_net_forward(x, w1, b1, w2, b2, *, block_b=128):
    """Fused Linear->ReLU->Linear.

    x:  (B, in)    float32 (cast to bf16 internally)
    w1: (in, H)    float32   b1: (H,) or (1, H)
    w2: (H, O)     float32   b2: (O,) or (1, O)
    returns (B, O) float32
    """
    B, in_f = x.shape
    H = w1.shape[1]
    O = w2.shape[1]

    # Pad feature dims to lane width (128) so stores/matmuls are lane-dense.
    Hp = _round_up(H, LANE)
    Op = _round_up(O, LANE)

    # Batch tile: multiple of 8 (sublane), capped at block_b; pad B to a
    # multiple of the tile so every grid step is a full block.
    tb = min(block_b, _round_up(B, 8))
    Bp = _round_up(B, tb)

    bf16 = jnp.bfloat16
    f32 = jnp.float32

    xp = jnp.zeros((Bp, in_f), bf16).at[:B, :].set(x.astype(bf16))
    w1p = jnp.zeros((in_f, Hp), bf16).at[:, :H].set(w1.astype(bf16))
    b1p = jnp.zeros((1, Hp), f32).at[:, :H].set(b1.reshape(1, -1).astype(f32))
    w2p = jnp.zeros((Hp, Op), bf16).at[:H, :O].set(w2.astype(bf16))
    b2p = jnp.zeros((1, Op), f32).at[:, :O].set(b2.reshape(1, -1).astype(f32))

    grid = (Bp // tb,)

    out = pl.pallas_call(
        mlp_kernel,
        out_shape=jax.ShapeDtypeStruct((Bp, Op), f32),
        grid_spec=pl.GridSpec(
            grid=grid,
            in_specs=[
                pl.BlockSpec((tb, in_f), lambda i: (i, 0)),   # x: streamed per tile
                pl.BlockSpec((in_f, Hp), lambda i: (0, 0)),   # W1: VMEM-resident
                pl.BlockSpec((1, Hp), lambda i: (0, 0)),      # b1: VMEM-resident
                pl.BlockSpec((Hp, Op), lambda i: (0, 0)),     # W2: VMEM-resident
                pl.BlockSpec((1, Op), lambda i: (0, 0)),      # b2: VMEM-resident
            ],
            out_specs=pl.BlockSpec((tb, Op), lambda i: (i, 0)),
        ),
        compiler_params=pltpu.CompilerParams(
            # Batch tiles are independent -> shard across TensorCores on v7x.
            dimension_semantics=("parallel",),
        ),
    )(xp, w1p, b1p, w2p, b2p)

    # Strip batch + feature padding.
    return out[:B, :O]


if __name__ == "__main__":
    # Module hyperparameters (forward implies 2-D input [batch, input_size]).
    batch = 256          # two 128-row grid steps -> real pipelining
    input_size = 16
    hidden_size = 32
    output_size = 4

    key = jax.random.PRNGKey(0)
    kx, kw1, kb1, kw2, kb2 = jax.random.split(key, 5)

    x = jax.random.normal(kx, (batch, input_size), dtype=jnp.float32)
    # Deterministic parameter init (PyTorch nn.Linear-like uniform bound).
    bound1 = 1.0 / (input_size ** 0.5)
    w1 = jax.random.uniform(kw1, (input_size, hidden_size), jnp.float32, -bound1, bound1)
    b1 = jax.random.uniform(kb1, (hidden_size,), jnp.float32, -bound1, bound1)
    bound2 = 1.0 / (hidden_size ** 0.5)
    w2 = jax.random.uniform(kw2, (hidden_size, output_size), jnp.float32, -bound2, bound2)
    b2 = jax.random.uniform(kb2, (output_size,), jnp.float32, -bound2, bound2)

    out = neural_net_forward(x, w1, b1, w2, b2)
    out = jax.block_until_ready(out)
    assert out.shape == (batch, output_size)

    # Pure-JAX reference using the same bf16-input / f32-accumulate recipe.
    xb, w1b, w2b = (a.astype(jnp.bfloat16) for a in (x, w1, w2))
    h_ref = jnp.maximum(
        jnp.dot(xb, w1b, preferred_element_type=jnp.float32) + b1[None, :], 0.0)
    ref = jnp.dot(h_ref.astype(jnp.bfloat16), w2b,
                  preferred_element_type=jnp.float32) + b2[None, :]
    assert jnp.allclose(out, ref, atol=1e-2, rtol=1e-2), "mismatch vs bf16 reference"

    # Sanity check against the full-f32 math (loose tolerance for bf16 inputs).
    ref_f32 = jnp.maximum(x @ w1 + b1[None, :], 0.0) @ w2 + b2[None, :]
    assert jnp.allclose(out, ref_f32, atol=5e-2, rtol=5e-2), "mismatch vs f32 reference"

    print("KERNEL_OK")
</pallas_src>

<mosaic_0001>
module attributes {stable_mosaic.version = 11 : i64} {
  func.func @mlp_kernel(%arg0: i32, %arg1: memref<128x16xbf16, #tpu.memory_space<vmem>>, %arg2: memref<16x128xbf16, #tpu.memory_space<vmem>>, %arg3: memref<1x128xf32, #tpu.memory_space<vmem>>, %arg4: memref<128x128xbf16, #tpu.memory_space<vmem>>, %arg5: memref<1x128xf32, #tpu.memory_space<vmem>>, %arg6: memref<128x128xf32, #tpu.memory_space<vmem>>) attributes {dimension_semantics = [#tpu.dimension_semantics<parallel>], iteration_bounds = array<i64: 2>, scalar_prefetch = 0 : i64, scratch_operands = 0 : i64, tpu.core_type = #tpu.core_type<tc>, window_params = [{transform_indices = @transform_0, window_bounds = array<i64: 128, 16>}, {pipeline_mode = #tpu.pipeline_mode<synchronous>, transform_indices = @transform_1, window_bounds = array<i64: 16, 128>}, {pipeline_mode = #tpu.pipeline_mode<synchronous>, transform_indices = @transform_2, window_bounds = array<i64: 1, 128>}, {pipeline_mode = #tpu.pipeline_mode<synchronous>, transform_indices = @transform_3, window_bounds = array<i64: 128, 128>}, {pipeline_mode = #tpu.pipeline_mode<synchronous>, transform_indices = @transform_4, window_bounds = array<i64: 1, 128>}, {transform_indices = @transform_5, window_bounds = array<i64: 128, 128>}]} {
    %c0 = arith.constant 0 : index
    %c0_0 = arith.constant 0 : index
    %0 = vector.load %arg1[%c0, %c0_0] : memref<128x16xbf16, #tpu.memory_space<vmem>>, vector<128x16xbf16>
    %c0_1 = arith.constant 0 : index
    %c0_2 = arith.constant 0 : index
    %1 = vector.load %arg2[%c0_1, %c0_2] : memref<16x128xbf16, #tpu.memory_space<vmem>>, vector<16x128xbf16>
    %cst = arith.constant dense<0.000000e+00> : vector<128x128xf32>
    %2 = tpu.matmul %0, %1, %cst {dimension_numbers = #tpu.dot_dimension_numbers<[1], [0], [0], [1], [0, 0, 1, 1], [], []>} : vector<128x16xbf16>, vector<16x128xbf16>, vector<128x128xf32> -> vector<128x128xf32>
    %c0_3 = arith.constant 0 : index
    %c0_4 = arith.constant 0 : index
    %3 = vector.load %arg3[%c0_3, %c0_4] : memref<1x128xf32, #tpu.memory_space<vmem>>, vector<1x128xf32>
    %4 = vector.broadcast %3 : vector<1x128xf32> to vector<128x128xf32>
    %5 = arith.addf %2, %4 : vector<128x128xf32>
    %cst_5 = arith.constant 0.000000e+00 : f32
    %6 = vector.broadcast %cst_5 : f32 to vector<128x128xf32>
    %7 = arith.maximumf %5, %6 : vector<128x128xf32>
    %8 = arith.truncf %7 : vector<128x128xf32> to vector<128x128xbf16>
    %c0_6 = arith.constant 0 : index
    %c0_7 = arith.constant 0 : index
    %9 = vector.load %arg4[%c0_6, %c0_7] : memref<128x128xbf16, #tpu.memory_space<vmem>>, vector<128x128xbf16>
    %cst_8 = arith.constant dense<0.000000e+00> : vector<128x128xf32>
    %10 = tpu.matmul %8, %9, %cst_8 {dimension_numbers = #tpu.dot_dimension_numbers<[1], [0], [0], [1], [0, 0, 1, 1], [], []>} : vector<128x128xbf16>, vector<128x128xbf16>, vector<128x128xf32> -> vector<128x128xf32>
    %c0_9 = arith.constant 0 : index
    %c0_10 = arith.constant 0 : index
    %11 = vector.load %arg5[%c0_9, %c0_10] : memref<1x128xf32, #tpu.memory_space<vmem>>, vector<1x128xf32>
    %12 = vector.broadcast %11 : vector<1x128xf32> to vector<128x128xf32>
    %13 = arith.addf %10, %12 : vector<128x128xf32>
    %c0_11 = arith.constant 0 : index
    %c0_12 = arith.constant 0 : index
    %14 = vector.load %arg6[%c0_11, %c0_12] : memref<128x128xf32, #tpu.memory_space<vmem>>, vector<128x128xf32>
    tpu.vector_store %arg6[%c0_11, %c0_12], %13 {strides = array<i32>} : memref<128x128xf32, #tpu.memory_space<vmem>>, vector<128x128xf32>,
    return
  }
  func.func @transform_0(%arg0: i32) -> (i32, i32) {
    %c0_i32 = arith.constant 0 : i32
    %c0_i32_0 = arith.constant 0 : i32
    return %arg0, %c0_i32 : i32, i32
  }
  func.func @transform_1(%arg0: i32) -> (i32, i32) {
    %c0_i32 = arith.constant 0 : i32
    %c0_i32_0 = arith.constant 0 : i32
    %c0_i32_1 = arith.constant 0 : i32
    return %c0_i32, %c0_i32_0 : i32, i32
  }
  func.func @transform_2(%arg0: i32) -> (i32, i32) {
    %c0_i32 = arith.constant 0 : i32
    %c0_i32_0 = arith.constant 0 : i32
    %c0_i32_1 = arith.constant 0 : i32
    return %c0_i32, %c0_i32_0 : i32, i32
  }
  func.func @transform_3(%arg0: i32) -> (i32, i32) {
    %c0_i32 = arith.constant 0 : i32
    %c0_i32_0 = arith.constant 0 : i32
    %c0_i32_1 = arith.constant 0 : i32
    return %c0_i32, %c0_i32_0 : i32, i32
  }
  func.func @transform_4(%arg0: i32) -> (i32, i32) {
    %c0_i32 = arith.constant 0 : i32
    %c0_i32_0 = arith.constant 0 : i32
    %c0_i32_1 = arith.constant 0 : i32
    return %c0_i32, %c0_i32_0 : i32, i32
  }
  func.func @transform_5(%arg0: i32) -> (i32, i32) {
    %c0_i32 = arith.constant 0 : i32
    %c0_i32_0 = arith.constant 0 : i32
    return %arg0, %c0_i32 : i32, i32
  }
}

</mosaic_0001>

<llo_original>
// kernel: tpu_custom_call.1
$region0: #{tpu_custom_call.1}
  #allocation0 [shape = 'u32[]', space=smem, size = 0x4, offset = 0x4, fixed_abs, tag = 'smem constant byte address 0x4 - core index']
  #allocation1 [shape = 'u32[72,128]{1,0:T(1,128)}', space=vmem, size = 0x9000, scoped, tag = 'internal scratch']
  %s0 = inlined_call_operand.vmem [shape: bf16[256,16], index: 0, kind: input, shape index: {}]
  %s1 = inlined_call_operand.vmem [shape: bf16[16,128], index: 1, kind: input, shape index: {}]
  %s2 = inlined_call_operand.vmem [shape: f32[1,128], index: 2, kind: input, shape index: {}]
  %s3 = inlined_call_operand.vmem [shape: bf16[128,128], index: 3, kind: input, shape index: {}]
  %s4 = inlined_call_operand.vmem [shape: f32[1,128], index: 4, kind: input, shape index: {}]
  %s5 = inlined_call_operand.hbm [shape: f32[256,128], index: 5, kind: output, shape index: {}]
  %s6 = sld [smem:[#allocation0]]
  $region53: #{tpu_custom_call.1} parent=0
    _
  %s8 = ssub.s32 1, %s6
  %s9 = scalar_select 0, %s8, %s6
  $region1: #{tpu_custom_call.1} parent=0
    #allocation2 [shape = 'u8[131072]{0}', space=vmem, size = 0x20000, scoped, tag = 'output window, operand 0']
    #allocation3 [shape = 's32[2]{0}', space=sflag, size = 0x8, scoped, tag = 'scoped memory for tpu_custom_call.1']
    %10 = vsyncpa [#allocation3], 0
    %s11 = scalar_lea.sflag [#allocation3], 1
    %12 = vsyncpa %s11, 0
    loop: start=0, step=1, limit=4
    $region2: #{tpu_custom_call.1} parent=1 // loop_pre_header
      _
    $region3: #{tpu_custom_call.1} parent=1 // loop_header
      %s14 = sphi 0, %s18
      %p15 = scmp.ge.s32.totalorder %s14, 4
      %s24 = sphi 0, %s26
      %s27 = sphi 0, %s24
      %s28 = sphi 0, %s27
      %s44 = sphi 0, %s28
      %s48 = sphi 0, %s48
      %s50 = sphi 0, %s48
      %s51 = sphi 0, %s50
      %s65 = sphi 0, %s51
      %s69 = sphi 0, %s69
      %s71 = sphi 0, %s69
      %s72 = sphi 0, %s71
      %s86 = sphi 0, %s72
      %s90 = sphi 0, %s90
      %s92 = sphi 0, %s90
      %s93 = sphi 0, %s92
      %s107 = sphi 0, %s93
      %s111 = sphi 0, %s111
      %s113 = sphi 0, %s111
      %s114 = sphi 0, %s113
      %s128 = sphi 0, %s114
      %s134 = sphi 0, %s136
      %s137 = sphi 0, %s134
      %s138 = sphi 0, %s137
      %s154 = sphi 0, %s138
    $region4: #{tpu_custom_call.1} parent=1 // loop_header_branch
      %17 = sbr.rel (%p15) target = $region8
    $region5: #{tpu_custom_call.1} parent=1 // loop_body
      %s19 = ssub.s32 %s14, 1
      %s20 = ssub.s32 %s14, 2
      %s21 = sadd.s32 %s14, 1
      %s22 = ssub.s32 %s14, %s21
      %p23 = scmp.eq.s32.totalorder %s22, 0
      %s25 = sadd.s32 %s24, 1
      %s26 = scalar_select %p23, %s24, %s25
      %p29 = pneg %p23
      %p30 = scmp.eq.s32.totalorder %s14, 1
      %p31 = por %p29, %p30
      %p32 = scmp.ne.s32.totalorder %s24, %s27
      %p33 = scmp.eq.s32.totalorder %s14, 0
      %p34 = por %p32, %p33
      %p35 = scmp.ne.s32.totalorder %s24, %s27
      %p36 = scmp.eq.s32.totalorder %s19, 1
      %p37 = por %p35, %p36
      %p38 = scmp.ne.s32.totalorder %s27, %s28
      %p39 = scmp.eq.s32.totalorder %s19, 0
      %p40 = por %p38, %p39
      %p41 = scmp.ne.s32.totalorder %s27, %s28
      %p42 = scmp.eq.s32.totalorder %s20, 1
      %p43 = por %p41, %p42
      %p45 = scmp.ne.s32.totalorder %s28, %s44
      %p46 = scmp.eq.s32.totalorder %s20, 0
      %p47 = por %p45, %p46
      %s49 = sadd.s32 %s48, 1
      %p52 = scmp.eq.s32.totalorder %s14, 1
      %p53 = scmp.ne.s32.totalorder %s48, %s50
      %p54 = scmp.eq.s32.totalorder %s14, 0
      %p55 = por %p53, %p54
      %p56 = scmp.ne.s32.totalorder %s48, %s50
      %p57 = scmp.eq.s32.totalorder %s19, 1
      %p58 = por %p56, %p57
      %p59 = scmp.ne.s32.totalorder %s50, %s51
      %p60 = scmp.eq.s32.totalorder %s19, 0
      %p61 = por %p59, %p60
      %p62 = scmp.ne.s32.totalorder %s50, %s51
      %p63 = scmp.eq.s32.totalorder %s20, 1
      %p64 = por %p62, %p63
      %p66 = scmp.ne.s32.totalorder %s51, %s65
      %p67 = scmp.eq.s32.totalorder %s20, 0
      %p68 = por %p66, %p67
      %s70 = sadd.s32 %s69, 1
      %p73 = scmp.eq.s32.totalorder %s14, 1
      %p74 = scmp.ne.s32.totalorder %s69, %s71
      %p75 = scmp.eq.s32.totalorder %s14, 0
      %p76 = por %p74, %p75
      %p77 = scmp.ne.s32.totalorder %s69, %s71
      %p78 = scmp.eq.s32.totalorder %s19, 1
      %p79 = por %p77, %p78
      %p80 = scmp.ne.s32.totalorder %s71, %s72
      %p81 = scmp.eq.s32.totalorder %s19, 0
      %p82 = por %p80, %p81
      %p83 = scmp.ne.s32.totalorder %s71, %s72
      %p84 = scmp.eq.s32.totalorder %s20, 1
      %p85 = por %p83, %p84
      %p87 = scmp.ne.s32.totalorder %s72, %s86
      %p88 = scmp.eq.s32.totalorder %s20, 0
      %p89 = por %p87, %p88
      %s91 = sadd.s32 %s90, 1
      %p94 = scmp.eq.s32.totalorder %s14, 1
      %p95 = scmp.ne.s32.totalorder %s90, %s92
      %p96 = scmp.eq.s32.totalorder %s14, 0
      %p97 = por %p95, %p96
      %p98 = scmp.ne.s32.totalorder %s90, %s92
      %p99 = scmp.eq.s32.totalorder %s19, 1
      %p100 = por %p98, %p99
      %p101 = scmp.ne.s32.totalorder %s92, %s93
      %p102 = scmp.eq.s32.totalorder %s19, 0
      %p103 = por %p101, %p102
      %p104 = scmp.ne.s32.totalorder %s92, %s93
      %p105 = scmp.eq.s32.totalorder %s20, 1
      %p106 = por %p104, %p105
      %p108 = scmp.ne.s32.totalorder %s93, %s107
      %p109 = scmp.eq.s32.totalorder %s20, 0
      %p110 = por %p108, %p109
      %s112 = sadd.s32 %s111, 1
      %p115 = scmp.eq.s32.totalorder %s14, 1
      %p116 = scmp.ne.s32.totalorder %s111, %s113
      %p117 = scmp.eq.s32.totalorder %s14, 0
      %p118 = por %p116, %p117
      %p119 = scmp.ne.s32.totalorder %s111, %s113
      %p120 = scmp.eq.s32.totalorder %s19, 1
      %p121 = por %p119, %p120
      %p122 = scmp.ne.s32.totalorder %s113, %s114
      %p123 = scmp.eq.s32.totalorder %s19, 0
      %p124 = por %p122, %p123
      %p125 = scmp.ne.s32.totalorder %s113, %s114
      %p126 = scmp.eq.s32.totalorder %s20, 1
      %p127 = por %p125, %p126
      %p129 = scmp.ne.s32.totalorder %s114, %s128
      %p130 = scmp.eq.s32.totalorder %s20, 0
      %p131 = por %p129, %p130
      %s132 = ssub.s32 %s14, %s21
      %p133 = scmp.eq.s32.totalorder %s132, 0
      %s135 = sadd.s32 %s134, 1
      %s136 = scalar_select %p133, %s134, %s135
      %p139 = pneg %p133
      %p140 = scmp.eq.s32.totalorder %s14, 1
      %p141 = por %p139, %p140
      %p142 = scmp.ne.s32.totalorder %s134, %s137
      %p143 = scmp.eq.s32.totalorder %s14, 0
      %p144 = por %p142, %p143
      %p145 = scmp.ne.s32.totalorder %s134, %s137
      %p146 = scmp.eq.s32.totalorder %s19, 1
      %p147 = por %p145, %p146
      %p148 = scmp.ne.s32.totalorder %s137, %s138
      %p149 = scmp.eq.s32.totalorder %s19, 0
      %p150 = por %p148, %p149
      %p151 = scmp.ne.s32.totalorder %s137, %s138
      %p152 = scmp.eq.s32.totalorder %s20, 1
      %p153 = por %p151, %p152
      %p155 = scmp.ne.s32.totalorder %s138, %s154
      %p156 = scmp.eq.s32.totalorder %s20, 0
      %p157 = por %p155, %p156
      %p158 = scmp.le.s32.totalorder 1, %s14
      %p159 = scmp.lt.s32.totalorder %s14, 3
      %p160 = pnand %p158, %p159
      %p161 = pneg %p160
      // Predicated region
      $region9: #{tpu_custom_call.1} parent=5 // pred_check
        _
      $region10: #{tpu_custom_call.1} parent=5 // pred_check_branch
        %163 = sbr.rel (%p160) target = $region12
      $region11: #{tpu_custom_call.1} parent=5 // pred_region
        %s164 = ssub.s32 %s14, 1
        // Predicated region
        $region13: #{tpu_custom_call.1} parent=11 // pred_check
          %p165 = pneg %p61
        $region14: #{tpu_custom_call.1} parent=11 // pred_check_branch
          %167 = sbr.rel (%p165) target = $region16
        $region15: #{tpu_custom_call.1} parent=11 // pred_region
          _
        $region16: #{tpu_custom_call.1} parent=11 // pred_fallthru
          _
        // Predicated region
        $region17: #{tpu_custom_call.1} parent=11 // pred_check
          %p168 = pneg %p82
        $region18: #{tpu_custom_call.1} parent=11 // pred_check_branch
          %170 = sbr.rel (%p168) target = $region20
        $region19: #{tpu_custom_call.1} parent=11 // pred_region
          _
        $region20: #{tpu_custom_call.1} parent=11 // pred_fallthru
          _
        // Predicated region
        $region21: #{tpu_custom_call.1} parent=11 // pred_check
          %p171 = pneg %p103
        $region22: #{tpu_custom_call.1} parent=11 // pred_check_branch
          %173 = sbr.rel (%p171) target = $region24
        $region23: #{tpu_custom_call.1} parent=11 // pred_region
          _
        $region24: #{tpu_custom_call.1} parent=11 // pred_fallthru
          _
        // Predicated region
        $region25: #{tpu_custom_call.1} parent=11 // pred_check
          %p174 = pneg %p124
        $region26: #{tpu_custom_call.1} parent=11 // pred_check_branch
          %176 = sbr.rel (%p174) target = $region28
        $region27: #{tpu_custom_call.1} parent=11 // pred_region
          _
        $region28: #{tpu_custom_call.1} parent=11 // pred_fallthru
          _
      $region12: #{tpu_custom_call.1} parent=5 // pred_fallthru
        _
      %p177 = scmp.lt.s32.totalorder %s14, 2
      // Predicated region
      $region29: #{tpu_custom_call.1} parent=5 // pred_check
        %p178 = pneg %p177
      $region30: #{tpu_custom_call.1} parent=5 // pred_check_branch
        %180 = sbr.rel (%p178) target = $region32
      $region31: #{tpu_custom_call.1} parent=5 // pred_region
        // Predicated region
        $region33: #{tpu_custom_call.1} parent=31 // pred_check
          %p181 = pneg %p34
        $region34: #{tpu_custom_call.1} parent=31 // pred_check_branch
          %183 = sbr.rel (%p181) target = $region36
        $region35: #{tpu_custom_call.1} parent=31 // pred_region
          %s184 = smul.u32 16, %s14
          %p185 = scmp.lt.s32.totalorder %s184, 31
          %s186 = scalar_select %p185, %s184, 31
          %s187 = smul.addr %s186, 4
          %s188 = scalar_lea.vmem %s0, %s187
          %s189 = smul.u32 16, %s14
        $region36: #{tpu_custom_call.1} parent=31 // pred_fallthru
          _
      $region32: #{tpu_custom_call.1} parent=5 // pred_fallthru
        _
      %p190 = scmp.le.s32.totalorder 1, %s14
      %p191 = scmp.lt.s32.totalorder %s14, 3
      %p192 = pnand %p190, %p191
      %p193 = pneg %p192
      // Predicated region
      $region37: #{tpu_custom_call.1} parent=5 // pred_check
        _
      $region38: #{tpu_custom_call.1} parent=5 // pred_check_branch
        %195 = sbr.rel (%p192) target = $region40
      $region39: #{tpu_custom_call.1} parent=5 // pred_region
        %s196 = ssub.s32 %s14, 1
        %s197 = smul.u32 16, %s19
        %p198 = scmp.lt.s32.totalorder %s197, 31
        %s199 = scalar_select %p198, %s197, 31
        %s200 = smul.addr %s199, 4
        %s201 = scalar_lea.vmem %s0, %s200
        %p202 = pneg %p40
        %p203 = pneg %p37
        %p204 = pneg %p61
        %p205 = pneg %p58
        %p206 = pneg %p82
        %p207 = pneg %p79
        %p208 = pneg %p103
        %p209 = pneg %p100
        %p210 = pneg %p124
        %p211 = pneg %p121
        %p212 = pneg %p150
        %p213 = pneg %p147
        %s214 = sand.u32 %s137, 1
        %s215 = scalar_lea.sflag [#allocation3], %s214
        %s216 = sand.u32 %s137, 1
        %s217 = smul.addr %s216, 128
        %s218 = scalar_lea.vmem [#allocation2], %s217
        %s219 = smul.u32 16, %s19
        %p220 = scmp.lt.s32.totalorder %s219, 31
        %s221 = scalar_select %p220, %s219, 31
        %s222 = smul.addr %s221, 4
        %s223 = scalar_lea.vmem %s0, %s222
        %s224 = smul.u32 16, %s19
        %s225 = smul.u32 16, %s19
        %v227 = vld [vmem:[%s223] sm:$0xf]
        %v228 = vld [vmem:[%s223 + $0x4] sm:$0xf]
        %v229 = vld [vmem:[%s223 + $0x8] sm:$0xf]
        %v230 = vld [vmem:[%s223 + $0xc] sm:$0xf]
        %v231 = vld [vmem:[%s223 + $0x10] sm:$0xf]
        %v232 = vld [vmem:[%s223 + $0x14] sm:$0xf]
        %v233 = vld [vmem:[%s223 + $0x18] sm:$0xf]
        %v234 = vld [vmem:[%s223 + $0x1c] sm:$0xf]
        %v235 = vld [vmem:[%s223 + $0x20] sm:$0xf]
        %v236 = vld [vmem:[%s223 + $0x24] sm:$0xf]
        %v237 = vld [vmem:[%s223 + $0x28] sm:$0xf]
        %v238 = vld [vmem:[%s223 + $0x2c] sm:$0xf]
        %v239 = vld [vmem:[%s223 + $0x30] sm:$0xf]
        %v240 = vld [vmem:[%s223 + $0x34] sm:$0xf]
        %v241 = vld [vmem:[%s223 + $0x38] sm:$0xf]
        %v242 = vld [vmem:[%s223 + $0x3c] sm:$0xf]
        %v243 = vld [vmem:[%s1] sm:$0xf]
        %v244 = vld [vmem:[%s1 + $0x4] sm:$0xf]
        %v245 = vld [vmem:[%s2] sm:$0x1]
        %v247 = vperm.slane %v245, 0
        %v265 = vunpack.c.l.b16 %v227
        %v266 = vunpack.c.l.b16 %v228
        %v267 = vunpack.c.l.b16 %v229
        %v268 = vunpack.c.l.b16 %v230
        %v269 = vunpack.c.l.b16 %v231
        %v270 = vunpack.c.l.b16 %v232
        %v271 = vunpack.c.l.b16 %v233
        %v272 = vunpack.c.l.b16 %v234
        %v273 = vunpack.c.l.b16 %v235
        %v274 = vunpack.c.l.b16 %v236
        %v275 = vunpack.c.l.b16 %v237
        %v276 = vunpack.c.l.b16 %v238
        %v277 = vunpack.c.l.b16 %v239
        %v278 = vunpack.c.l.b16 %v240
        %v279 = vunpack.c.l.b16 %v241
        %v280 = vunpack.c.l.b16 %v242
        %v281 = vpack.c.b16 %v266, %v265
        %v282 = vpack.c.b16 %v268, %v267
        %v283 = vpack.c.b16 %v270, %v269
        %v284 = vpack.c.b16 %v272, %v271
        %v285 = vpack.c.b16 %v274, %v273
        %v286 = vpack.c.b16 %v276, %v275
        %v287 = vpack.c.b16 %v278, %v277
        %v288 = vpack.c.b16 %v280, %v279
        %v291 = vunpack.c.l.b16 %v243
        %v292 = vunpack.c.l.b16 %v244
        %v293 = vpack.c.b16 %v292, %v291
        %vm295 = vcmask 130048
        %v297 = vsel %vm295, %v281, 0
        %v300 = vsel %vm295, %v282, 0
        %v303 = vsel %vm295, %v283, 0
        %v306 = vsel %vm295, %v284, 0
        %v309 = vsel %vm295, %v285, 0
        %v312 = vsel %vm295, %v286, 0
        %v315 = vsel %vm295, %v287, 0
        %v318 = vsel %vm295, %v288, 0
        %320 = vmatpush.bf16.msra.mxu0 0
        %321 = vmatpush.bf16.msra.mxu0 0
        %322 = vmatpush.bf16.msra.mxu0 0
        %323 = vmatpush.bf16.msra.mxu0 0
        %324 = vmatpush.bf16.msra.mxu0 0
        %325 = vmatpush.bf16.msra.mxu0 0
        %326 = vmatpush.bf16.msra.mxu0 0
        %327 = vmatpush.bf16.msra.mxu0 %v293
        %328 = vmatmul.bf16.gmra.mxu0 %v297
        %v329 = vpop.f32.mrf.mxu0
        %v330 = vadd.f32 %v247, %v329
        %v331 = vpop.f32.mrf.mxu0
        %v332 = vadd.f32 %v247, %v331
        %333 = vmatmul.bf16.gmra.mxu0 %v300
        %v334 = vpop.f32.mrf.mxu0
        %v335 = vadd.f32 %v247, %v334
        %v336 = vpop.f32.mrf.mxu0
        %v337 = vadd.f32 %v247, %v336
        %338 = vmatmul.bf16.gmra.mxu0 %v303
        %v339 = vpop.f32.mrf.mxu0
        %v340 = vadd.f32 %v247, %v339
        %v341 = vpop.f32.mrf.mxu0
        %v342 = vadd.f32 %v247, %v341
        %343 = vmatmul.bf16.gmra.mxu0 %v306
        %v344 = vpop.f32.mrf.mxu0
        %v345 = vadd.f32 %v247, %v344
        %v346 = vpop.f32.mrf.mxu0
        %v347 = vadd.f32 %v247, %v346
        %348 = vmatmul.bf16.gmra.mxu0 %v309
        %v349 = vpop.f32.mrf.mxu0
        %v350 = vadd.f32 %v247, %v349
        %v351 = vpop.f32.mrf.mxu0
        %v352 = vadd.f32 %v247, %v351
        %353 = vmatmul.bf16.gmra.mxu0 %v312
        %v354 = vpop.f32.mrf.mxu0
        %v355 = vadd.f32 %v247, %v354
        %v356 = vpop.f32.mrf.mxu0
        %v357 = vadd.f32 %v247, %v356
        %358 = vmatmul.bf16.gmra.mxu0 %v315
        %v359 = vpop.f32.mrf.mxu0
        %v360 = vadd.f32 %v247, %v359
        %v361 = vpop.f32.mrf.mxu0
        %v362 = vadd.f32 %v247, %v361
        %363 = vmatmul.bf16.gmra.mxu0 %v318
        %v364 = vpop.f32.mrf.mxu0
        %v365 = vadd.f32 %v247, %v364
        %v366 = vpop.f32.mrf.mxu0
        %v367 = vadd.f32 %v247, %v366
        %368 = vdwg.mxu0
        %v369 = vmax.f32 %v330, 0.0
        %v370 = vmax.f32 %v332, 0.0
        %v371 = vmax.f32 %v335, 0.0
        %v372 = vmax.f32 %v337, 0.0
        %v373 = vmax.f32 %v340, 0.0
        %v374 = vmax.f32 %v342, 0.0
        %v375 = vmax.f32 %v345, 0.0
        %v376 = vmax.f32 %v347, 0.0
        %v377 = vmax.f32 %v350, 0.0
        %v378 = vmax.f32 %v352, 0.0
        %v379 = vmax.f32 %v355, 0.0
        %v380 = vmax.f32 %v357, 0.0
        %v381 = vmax.f32 %v360, 0.0
        %v382 = vmax.f32 %v362, 0.0
        %v383 = vmax.f32 %v365, 0.0
        %v384 = vmax.f32 %v367, 0.0
        %v385 = vpack.c.bf16 %v370, %v369
        %v386 = vpack.c.bf16 %v372, %v371
        %v387 = vpack.c.bf16 %v374, %v373
        %v388 = vpack.c.bf16 %v376, %v375
        %v389 = vpack.c.bf16 %v378, %v377
        %v390 = vpack.c.bf16 %v380, %v379
        %v391 = vpack.c.bf16 %v382, %v381
        %v392 = vpack.c.bf16 %v384, %v383
        %v393 = vld [vmem:[%s3] sm:$0xf]
        %v394 = vld [vmem:[%s3 + $0x4] sm:$0xf]
        %v395 = vld [vmem:[%s3 + $0x8] sm:$0xf]
        %v396 = vld [vmem:[%s3 + $0xc] sm:$0xf]
        %v397 = vld [vmem:[%s3 + $0x10] sm:$0xf]
        %v398 = vld [vmem:[%s3 + $0x14] sm:$0xf]
        %v399 = vld [vmem:[%s3 + $0x18] sm:$0xf]
        %v400 = vld [vmem:[%s3 + $0x1c] sm:$0xf]
        %v401 = vld [vmem:[%s3 + $0x20] sm:$0xf]
        %v402 = vld [vmem:[%s3 + $0x24] sm:$0xf]
        %v403 = vld [vmem:[%s3 + $0x28] sm:$0xf]
        %v404 = vld [vmem:[%s3 + $0x2c] sm:$0xf]
        %v405 = vld [vmem:[%s3 + $0x30] sm:$0xf]
        %v406 = vld [vmem:[%s3 + $0x34] sm:$0xf]
        %v407 = vld [vmem:[%s3 + $0x38] sm:$0xf]
        %v408 = vld [vmem:[%s3 + $0x3c] sm:$0xf]
        %v409 = vld [vmem:[%s4] sm:$0x1]
        %v411 = vperm.slane %v409, 0
        %v429 = vunpack.c.l.b16 %v393
        %v430 = vunpack.c.l.b16 %v394
        %v431 = vunpack.c.l.b16 %v395
        %v432 = vunpack.c.l.b16 %v396
        %v433 = vunpack.c.l.b16 %v397
        %v434 = vunpack.c.l.b16 %v398
        %v435 = vunpack.c.l.b16 %v399
        %v436 = vunpack.c.l.b16 %v400
        %v437 = vunpack.c.l.b16 %v401
        %v438 = vunpack.c.l.b16 %v402
        %v439 = vunpack.c.l.b16 %v403
        %v440 = vunpack.c.l.b16 %v404
        %v441 = vunpack.c.l.b16 %v405
        %v442 = vunpack.c.l.b16 %v406
        %v443 = vunpack.c.l.b16 %v407
        %v444 = vunpack.c.l.b16 %v408
        %v445 = vpack.c.b16 %v430, %v429
        %v446 = vpack.c.b16 %v432, %v431
        %v447 = vpack.c.b16 %v434, %v433
        %v448 = vpack.c.b16 %v436, %v435
        %v449 = vpack.c.b16 %v438, %v437
        %v450 = vpack.c.b16 %v440, %v439
        %v451 = vpack.c.b16 %v442, %v441
        %v452 = vpack.c.b16 %v444, %v443
        %461 = vmatpush.bf16.msra.mxu0 %v452
        %462 = vmatpush.bf16.msra.mxu0 %v451
        %463 = vmatpush.bf16.msra.mxu0 %v450
        %464 = vmatpush.bf16.msra.mxu0 %v449
        %465 = vmatpush.bf16.msra.mxu0 %v448
        %466 = vmatpush.bf16.msra.mxu0 %v447
        %467 = vmatpush.bf16.msra.mxu0 %v446
        %468 = vmatpush.bf16.msra.mxu0 %v445
        %469 = vmatmul.bf16.gmra.mxu0 %v385
        %v470 = vpop.f32.mrf.mxu0
        %v471 = vadd.f32 %v411, %v470
        %v472 = vpop.f32.mrf.mxu0
        %v473 = vadd.f32 %v411, %v472
        %474 = vmatmul.bf16.gmra.mxu0 %v386
        %v475 = vpop.f32.mrf.mxu0
        %v476 = vadd.f32 %v411, %v475
        %v477 = vpop.f32.mrf.mxu0
        %v478 = vadd.f32 %v411, %v477
        %479 = vmatmul.bf16.gmra.mxu0 %v387
        %v480 = vpop.f32.mrf.mxu0
        %v481 = vadd.f32 %v411, %v480
        %v482 = vpop.f32.mrf.mxu0
        %v483 = vadd.f32 %v411, %v482
        %484 = vmatmul.bf16.gmra.mxu0 %v388
        %v485 = vpop.f32.mrf.mxu0
        %v486 = vadd.f32 %v411, %v485
        %v487 = vpop.f32.mrf.mxu0
        %v488 = vadd.f32 %v411, %v487
        %489 = vmatmul.bf16.gmra.mxu0 %v389
        %v490 = vpop.f32.mrf.mxu0
        %v491 = vadd.f32 %v411, %v490
        %v492 = vpop.f32.mrf.mxu0
        %v493 = vadd.f32 %v411, %v492
        %494 = vmatmul.bf16.gmra.mxu0 %v390
        %v495 = vpop.f32.mrf.mxu0
        %v496 = vadd.f32 %v411, %v495
        %v497 = vpop.f32.mrf.mxu0
        %v498 = vadd.f32 %v411, %v497
        %499 = vmatmul.bf16.gmra.mxu0 %v391
        %v500 = vpop.f32.mrf.mxu0
        %v501 = vadd.f32 %v411, %v500
        %v502 = vpop.f32.mrf.mxu0
        %v503 = vadd.f32 %v411, %v502
        %504 = vmatmul.bf16.gmra.mxu0 %v392
        %v505 = vpop.f32.mrf.mxu0
        %v506 = vadd.f32 %v411, %v505
        %v507 = vpop.f32.mrf.mxu0
        %v508 = vadd.f32 %v411, %v507
        %509 = vdwg.mxu0
        %510 = vst [vmem:[%s218] sm:$0xff] %v471
        %511 = vst [vmem:[%s218 + $0x8] sm:$0xff] %v473
        %512 = vst [vmem:[%s218 + $0x10] sm:$0xff] %v476
        %513 = vst [vmem:[%s218 + $0x18] sm:$0xff] %v478
        %514 = vst [vmem:[%s218 + $0x20] sm:$0xff] %v481
        %515 = vst [vmem:[%s218 + $0x28] sm:$0xff] %v483
        %516 = vst [vmem:[%s218 + $0x30] sm:$0xff] %v486
        %517 = vst [vmem:[%s218 + $0x38] sm:$0xff] %v488
        %518 = vst [vmem:[%s218 + $0x40] sm:$0xff] %v491
        %519 = vst [vmem:[%s218 + $0x48] sm:$0xff] %v493
        %520 = vst [vmem:[%s218 + $0x50] sm:$0xff] %v496
        %521 = vst [vmem:[%s218 + $0x58] sm:$0xff] %v498
        %522 = vst [vmem:[%s218 + $0x60] sm:$0xff] %v501
        %523 = vst [vmem:[%s218 + $0x68] sm:$0xff] %v503
        %524 = vst [vmem:[%s218 + $0x70] sm:$0xff] %v506
        %525 = vst [vmem:[%s218 + $0x78] sm:$0xff] %v508
        %s526 = sand.u32 %s137, 1
        %s527 = scalar_lea.sflag [#allocation3], %s526
        %s528 = sand.u32 %s137, 1
        %s529 = smul.addr %s528, 128
        %s530 = scalar_lea.vmem [#allocation2], %s529
        // Predicated region
        $region41: #{tpu_custom_call.1} parent=39 // pred_check
          %p531 = pneg %p147
        $region42: #{tpu_custom_call.1} parent=39 // pred_check_branch
          %533 = sbr.rel (%p531) target = $region44
        $region43: #{tpu_custom_call.1} parent=39 // pred_region
          %s534 = smul.u32 16, %s19
          %536 = vsyncadd %s527, 0
          %s537 = smul.addr %s534, 8
          %s538 = scalar_lea.hbm %s5, %s537
          %s539 = sshll.u32 %s530, 4
          %s540 = int_to_ptr.vmem [resolvable:$true] %s539
          %s541 = sshll.u32 %s538, 4
          %s542 = int_to_ptr.hbm [resolvable:$true] %s541
          %547 = dma.vmem_to_hbm [thread:$0]  %s540, 2048, %s542, %s527, 128, 128, 8
        $region44: #{tpu_custom_call.1} parent=39 // pred_fallthru
          _
      $region40: #{tpu_custom_call.1} parent=5 // pred_fallthru
        _
      %p548 = scmp.le.s32.totalorder 2, %s14
      // Predicated region
      $region45: #{tpu_custom_call.1} parent=5 // pred_check
        %p549 = pneg %p548
      $region46: #{tpu_custom_call.1} parent=5 // pred_check_branch
        %551 = sbr.rel (%p549) target = $region48
      $region47: #{tpu_custom_call.1} parent=5 // pred_region
        %s552 = ssub.s32 %s14, 2
        // Predicated region
        $region49: #{tpu_custom_call.1} parent=47 // pred_check
          %p553 = pneg %p153
        $region50: #{tpu_custom_call.1} parent=47 // pred_check_branch
          %555 = sbr.rel (%p553) target = $region52
        $region51: #{tpu_custom_call.1} parent=47 // pred_region
          %s556 = sand.u32 %s138, 1
          %s557 = scalar_lea.sflag [#allocation3], %s556
          %s558 = sand.u32 %s138, 1
          %s559 = smul.addr %s558, 128
          %s560 = scalar_lea.vmem [#allocation2], %s559
          %562 = dma.done %s557, 2048
        $region52: #{tpu_custom_call.1} parent=47 // pred_fallthru
          _
      $region48: #{tpu_custom_call.1} parent=5 // pred_fallthru
        _
    $region6: #{tpu_custom_call.1} parent=1 // loop_footer
      %s18 = sadd.s32 1, %s14
    $region7: #{tpu_custom_call.1} parent=1 // loop_footer_branch
      %13 = sbr.rel target = $region3
    $region8: #{tpu_custom_call.1} parent=1 // loop_exit
      _
    %563 = vsyncpa [#allocation3], 1
    %s564 = scalar_lea.sflag [#allocation3], 1
    %565 = vsyncpa %s564, 1

</llo_original>
